<compile_context>
chip_gen: v6e
topology: v6e:2x2x1
jax: 0.10.0
libtpu: 0.0.40
codegen_flags: <defaults>
</compile_context>

<pallas_src>
import functools
import math

import jax
import jax.numpy as jnp
from jax.experimental import pallas as pl
from jax.experimental.pallas import tpu as pltpu

_INV_SQRT2 = 1.0 / math.sqrt(2.0)

# VMEM sizing: budget for tile selection is kept well under v7x's 64 MiB per
# TensorCore (scoped default 32 MiB); the compiler limit is raised to 48 MiB,
# which is also a win on v5e (16 MiB scoped default, 128 MiB physical).
_VMEM_BUDGET_BYTES = 36 * 1024 * 1024
_VMEM_LIMIT_BYTES = 48 * 1024 * 1024


def _erf_approx(z):
    """erf via Abramowitz & Stegun 7.1.26 (max abs err ~1.5e-7), Mosaic-safe ops.

    The 1/(1+p|z|) divide is done with the approximate EUP reciprocal so the
    whole chain costs one exp + one rcp on the EUP plus cheap VALU mul/adds.
    """
    # TODO(synk): switch to jax.lax.erf if/when its Pallas-TPU lowering is guaranteed.
    p = 0.3275911
    a1, a2, a3, a4, a5 = (0.254829592, -0.284496736, 1.421413741,
                          -1.453152027, 1.061405429)
    sign = jnp.where(z < 0.0, -1.0, 1.0)
    za = jnp.abs(z)
    t = pl.reciprocal(1.0 + p * za, approx=True)      # EUP rcp, frees the VALU
    poly = ((((a5 * t + a4) * t + a3) * t + a2) * t + a1) * t
    return sign * (1.0 - poly * jnp.exp(-(za * za)))


def _gelu(x):
    # gelu(x) = x * 0.5 * (1 + erf(x / sqrt(2)))  (erf form, as in the PyTorch module)
    return x * 0.5 * (1.0 + _erf_approx(x * _INV_SQRT2))


def _head_transform_kernel(x_ref, w_ref, b_ref, gamma_ref, beta_ref, o_ref, *, eps):
    # x_ref: (TM, H) bf16 rows of the flattened (N, H) input; w_ref: (H, C) bf16.
    # bf16 x bf16 -> f32 accumulation on the MXU.
    h = jnp.dot(x_ref[...], w_ref[...],
                preferred_element_type=jnp.float32) + b_ref[...]

    h = _gelu(h)                                       # f32 elementwise (v5e-safe)

    # LayerNorm over C (=clip_size), biased variance (torch.nn.LayerNorm).
    mu = jnp.mean(h, axis=-1, keepdims=True)
    cen = h - mu
    var = jnp.mean(cen * cen, axis=-1, keepdims=True)
    inv_std = jax.lax.rsqrt(var + eps)                 # EUP rsqrt
    o_ref[...] = ((cen * inv_std) * gamma_ref[...] + beta_ref[...]).astype(o_ref.dtype)


def _pick_tile_m(n_rows, h, c, *, x_bytes, out_bytes, w_bytes, const_bytes,
                 budget_bytes):
    """Largest power-of-two row tile whose double-buffered footprint fits budget.

    Footprint model (conservative: constants also counted double-buffered):
        2*tm*(H*x_bytes + C*out_bytes) + 2*(weight + bias/gamma/beta)
    """
    tm = 8
    for cand in (8, 16, 32, 64, 128, 256, 512, 1024, 2048):
        foot = 2 * cand * (h * x_bytes + c * out_bytes) + 2 * (w_bytes + const_bytes)
        if foot > budget_bytes:
            break
        tm = cand
        if cand >= n_rows:
            break
    # Keep >= 2 grid blocks when there are enough rows (v7x megacore sharding).
    while tm > 8 and pl.cdiv(n_rows, tm) < 2:
        tm //= 2
    return tm


def bert_prediction_head_transform(hidden_states, w, b, gamma, beta, *,
                                   eps=1e-12, out_dtype=None):
    """hidden_states: [B, S, H]; w: [H, C] (in, out); b/gamma/beta: [C] or [1, C].

    Returns [B, S, C]. The matmul runs in bf16 (f32 accumulation); pass
    out_dtype=jnp.bfloat16 to also halve the writeback if downstream allows.
    """
    B, S, H = hidden_states.shape
    C = w.shape[1]
    N = B * S
    if out_dtype is None:
        out_dtype = hidden_states.dtype

    # Normalize parameter shapes (PyTorch exports (C,) vectors).
    b = jnp.asarray(b, jnp.float32).reshape(1, C)
    gamma = jnp.asarray(gamma, jnp.float32).reshape(1, C)
    beta = jnp.asarray(beta, jnp.float32).reshape(1, C)

    # bf16 operands for the MXU; flatten batch*seq into the matmul M dimension.
    # NOTE: tiny H (e.g. the 32 used in the demo) under-fills the MXU K depth;
    # real BERT H=768/1024 is the representative shape.
    x2d = hidden_states.reshape(N, H).astype(jnp.bfloat16)
    w_bf = w.astype(jnp.bfloat16)

    x_bytes = 2
    out_bytes = jnp.dtype(out_dtype).itemsize
    w_bytes = H * C * 2
    const_bytes = 3 * C * 4
    tm = _pick_tile_m(N, H, C, x_bytes=x_bytes, out_bytes=out_bytes,
                      w_bytes=w_bytes, const_bytes=const_bytes,
                      budget_bytes=_VMEM_BUDGET_BYTES)

    # Pad N up to a whole number of tiles; keep the block count even when >1 so
    # the two v7x TensorCores get balanced work.
    blocks = pl.cdiv(N, tm)
    if blocks > 1 and blocks % 2 == 1:
        blocks += 1
    padded_n = blocks * tm
    if padded_n != N:
        x2d = jnp.pad(x2d, ((0, padded_n - N), (0, 0)))

    kernel = functools.partial(_head_transform_kernel, eps=eps)

    cost = pl.CostEstimate(
        flops=2 * padded_n * H * C + 16 * padded_n * C,   # matmul + gelu/LN epilogue
        transcendentals=2 * padded_n * C,                 # exp + rcp per element
        bytes_accessed=(padded_n * H * x_bytes + w_bytes + const_bytes
                        + padded_n * C * out_bytes),
    )

    # TODO(synk): single-buffer the constant operands (pipeline_mode=pl.Buffered(1))
    # once that is verified to lower on the target jax version; the budget above
    # already assumes they are double-buffered, so this is only a VMEM reclaim.
    out2d = pl.pallas_call(
        kernel,
        out_shape=jax.ShapeDtypeStruct((padded_n, C), out_dtype),
        grid=(blocks,),
        in_specs=[
            pl.BlockSpec((tm, H), lambda i: (i, 0)),   # activation tile (bf16)
            pl.BlockSpec((H, C), lambda i: (0, 0)),    # dense weight (bf16, resident)
            pl.BlockSpec((1, C), lambda i: (0, 0)),    # dense bias (f32)
            pl.BlockSpec((1, C), lambda i: (0, 0)),    # LayerNorm gamma
            pl.BlockSpec((1, C), lambda i: (0, 0)),    # LayerNorm beta
        ],
        out_specs=pl.BlockSpec((tm, C), lambda i: (i, 0)),  # lane-dense: C % 128 == 0
        compiler_params=pltpu.CompilerParams(
            dimension_semantics=("parallel",),
            vmem_limit_bytes=_VMEM_LIMIT_BYTES,
        ),
        cost_estimate=cost,
    )(x2d, w_bf, b, gamma, beta)

    return out2d[:N].reshape(B, S, C)


def _reference(hidden_states, w, b, gamma, beta, eps=1e-12):
    """Plain-JAX reference of the PyTorch forward (exact erf gelu), with the
    matmul also fed bf16 operands + f32 accumulation so it matches the kernel's
    intended numerics."""
    B, S, H = hidden_states.shape
    x = hidden_states.reshape(-1, H).astype(jnp.bfloat16)
    h = jnp.dot(x, w.astype(jnp.bfloat16),
                preferred_element_type=jnp.float32) + jnp.reshape(b, (-1,))
    h = h * 0.5 * (1.0 + jax.lax.erf(h * _INV_SQRT2))
    mu = jnp.mean(h, axis=-1, keepdims=True)
    c = h - mu
    var = jnp.mean(c * c, axis=-1, keepdims=True)
    out = (c * jax.lax.rsqrt(var + eps)) * jnp.reshape(gamma, (-1,)) + jnp.reshape(beta, (-1,))
    return out.reshape(B, S, -1)


if __name__ == "__main__":
    B, S, H = 2, 8, 32          # batch, seq, hidden_size (small demo shape)
    C = 512                     # clip_size (fixed in the module)
    EPS = 1e-12                 # config.layer_norm_eps (BERT default)

    key = jax.random.PRNGKey(0)
    k_h, k_w, k_b, k_g, k_bt = jax.random.split(key, 5)

    hidden_states = jax.random.normal(k_h, (B, S, H), dtype=jnp.float32)

    # Dense(H -> C), stored (in, out); transpose PyTorch (out, in) weights when porting.
    w = jax.random.normal(k_w, (H, C), dtype=jnp.float32) / math.sqrt(H)
    b = jax.random.normal(k_b, (1, C), dtype=jnp.float32) * 0.02
    gamma = 1.0 + jax.random.normal(k_g, (1, C), dtype=jnp.float32) * 0.02
    beta = jax.random.normal(k_bt, (1, C), dtype=jnp.float32) * 0.02

    out = bert_prediction_head_transform(hidden_states, w, b, gamma, beta, eps=EPS)
    out = jax.block_until_ready(out)

    ref = _reference(hidden_states, w, b, gamma, beta, eps=EPS)
    assert out.shape == (B, S, C)
    # Tolerance accounts for the A&S erf approximation (~1.5e-7) and the approx
    # EUP reciprocal inside it (~1e-3 post-LayerNorm); the bf16 matmul itself is
    # matched by the reference.
    assert jnp.allclose(out, ref, atol=2e-2, rtol=2e-2), "mismatch vs reference"

    print("KERNEL_OK")
</pallas_src>

<mosaic_0001>
module attributes {stable_mosaic.version = 11 : i64} {
  func.func @_head_transform_kernel(%arg0: i32, %arg1: memref<8x32xbf16, #tpu.memory_space<vmem>>, %arg2: memref<32x512xbf16, #tpu.memory_space<vmem>>, %arg3: memref<1x512xf32, #tpu.memory_space<vmem>>, %arg4: memref<1x512xf32, #tpu.memory_space<vmem>>, %arg5: memref<1x512xf32, #tpu.memory_space<vmem>>, %arg6: memref<8x512xf32, #tpu.memory_space<vmem>>) attributes {dimension_semantics = [#tpu.dimension_semantics<parallel>], iteration_bounds = array<i64: 2>, scalar_prefetch = 0 : i64, scratch_operands = 0 : i64, tpu.core_type = #tpu.core_type<tc>, window_params = [{transform_indices = @transform_0, window_bounds = array<i64: 8, 32>}, {pipeline_mode = #tpu.pipeline_mode<synchronous>, transform_indices = @transform_1, window_bounds = array<i64: 32, 512>}, {pipeline_mode = #tpu.pipeline_mode<synchronous>, transform_indices = @transform_2, window_bounds = array<i64: 1, 512>}, {pipeline_mode = #tpu.pipeline_mode<synchronous>, transform_indices = @transform_3, window_bounds = array<i64: 1, 512>}, {pipeline_mode = #tpu.pipeline_mode<synchronous>, transform_indices = @transform_4, window_bounds = array<i64: 1, 512>}, {transform_indices = @transform_5, window_bounds = array<i64: 8, 512>}]} {
    %c0 = arith.constant 0 : index
    %c0_0 = arith.constant 0 : index
    %0 = vector.load %arg1[%c0, %c0_0] : memref<8x32xbf16, #tpu.memory_space<vmem>>, vector<8x32xbf16>
    %c0_1 = arith.constant 0 : index
    %c0_2 = arith.constant 0 : index
    %1 = vector.load %arg2[%c0_1, %c0_2] : memref<32x512xbf16, #tpu.memory_space<vmem>>, vector<32x512xbf16>
    %cst = arith.constant dense<0.000000e+00> : vector<8x512xf32>
    %2 = tpu.matmul %0, %1, %cst {dimension_numbers = #tpu.dot_dimension_numbers<[1], [0], [0], [1], [0, 0, 1, 1], [], []>} : vector<8x32xbf16>, vector<32x512xbf16>, vector<8x512xf32> -> vector<8x512xf32>
    %c0_3 = arith.constant 0 : index
    %c0_4 = arith.constant 0 : index
    %3 = vector.load %arg3[%c0_3, %c0_4] : memref<1x512xf32, #tpu.memory_space<vmem>>, vector<1x512xf32>
    %4 = vector.broadcast %3 : vector<1x512xf32> to vector<8x512xf32>
    %5 = arith.addf %2, %4 : vector<8x512xf32>
    %cst_5 = arith.constant 5.000000e-01 : f32
    %6 = vector.broadcast %cst_5 : f32 to vector<8x512xf32>
    %7 = arith.mulf %5, %6 : vector<8x512xf32>
    %cst_6 = arith.constant 0.707106769 : f32
    %8 = vector.broadcast %cst_6 : f32 to vector<8x512xf32>
    %9 = arith.mulf %5, %8 : vector<8x512xf32>
    %cst_7 = arith.constant 0.000000e+00 : f32
    %10 = vector.broadcast %cst_7 : f32 to vector<8x512xf32>
    %11 = arith.cmpf olt, %9, %10 : vector<8x512xf32>
    %cst_8 = arith.constant -1.000000e+00 : f32
    %cst_9 = arith.constant 1.000000e+00 : f32
    %12 = vector.broadcast %cst_8 : f32 to vector<8x512xf32>
    %13 = vector.broadcast %cst_9 : f32 to vector<8x512xf32>
    %14 = arith.select %11, %12, %13 : vector<8x512xi1>, vector<8x512xf32>
    %15 = math.absf %9 : vector<8x512xf32>
    %cst_10 = arith.constant 0.327591091 : f32
    %16 = vector.broadcast %cst_10 : f32 to vector<8x512xf32>
    %17 = arith.mulf %16, %15 : vector<8x512xf32>
    %cst_11 = arith.constant 1.000000e+00 : f32
    %18 = vector.broadcast %cst_11 : f32 to vector<8x512xf32>
    %19 = arith.addf %18, %17 : vector<8x512xf32>
    %20 = tpu.reciprocal %19 {approx = true} : vector<8x512xf32> -> vector<8x512xf32>
    %cst_12 = arith.constant 1.06140542 : f32
    %21 = vector.broadcast %cst_12 : f32 to vector<8x512xf32>
    %22 = arith.mulf %21, %20 : vector<8x512xf32>
    %cst_13 = arith.constant -1.45315206 : f32
    %23 = vector.broadcast %cst_13 : f32 to vector<8x512xf32>
    %24 = arith.addf %22, %23 : vector<8x512xf32>
    %25 = arith.mulf %24, %20 : vector<8x512xf32>
    %cst_14 = arith.constant 1.42141378 : f32
    %26 = vector.broadcast %cst_14 : f32 to vector<8x512xf32>
    %27 = arith.addf %25, %26 : vector<8x512xf32>
    %28 = arith.mulf %27, %20 : vector<8x512xf32>
    %cst_15 = arith.constant -0.284496725 : f32
    %29 = vector.broadcast %cst_15 : f32 to vector<8x512xf32>
    %30 = arith.addf %28, %29 : vector<8x512xf32>
    %31 = arith.mulf %30, %20 : vector<8x512xf32>
    %cst_16 = arith.constant 0.254829586 : f32
    %32 = vector.broadcast %cst_16 : f32 to vector<8x512xf32>
    %33 = arith.addf %31, %32 : vector<8x512xf32>
    %34 = arith.mulf %33, %20 : vector<8x512xf32>
    %35 = arith.mulf %15, %15 : vector<8x512xf32>
    %cst_17 = arith.constant 0.000000e+00 : f32
    %36 = vector.broadcast %cst_17 : f32 to vector<8x512xf32>
    %37 = arith.subf %36, %35 : vector<8x512xf32>
    %38 = math.exp %37 : vector<8x512xf32>
    %39 = arith.mulf %34, %38 : vector<8x512xf32>
    %cst_18 = arith.constant 1.000000e+00 : f32
    %40 = vector.broadcast %cst_18 : f32 to vector<8x512xf32>
    %41 = arith.subf %40, %39 : vector<8x512xf32>
    %42 = arith.mulf %14, %41 : vector<8x512xf32>
    %cst_19 = arith.constant 1.000000e+00 : f32
    %43 = vector.broadcast %cst_19 : f32 to vector<8x512xf32>
    %44 = arith.addf %43, %42 : vector<8x512xf32>
    %45 = arith.mulf %7, %44 : vector<8x512xf32>
    %cst_20 = arith.constant dense<0.000000e+00> : vector<8xf32>
    %46 = vector.multi_reduction <add>, %45, %cst_20 [1] : vector<8x512xf32> to vector<8xf32>
    %47 = vector.shape_cast %46 : vector<8xf32> to vector<8x1xf32>
    %cst_21 = arith.constant 5.120000e+02 : f32
    %48 = vector.broadcast %cst_21 : f32 to vector<8x1xf32>
    %49 = arith.divf %47, %48 : vector<8x1xf32>
    %50 = vector.broadcast %49 : vector<8x1xf32> to vector<8x512xf32>
    %51 = arith.subf %45, %50 : vector<8x512xf32>
    %52 = arith.mulf %51, %51 : vector<8x512xf32>
    %cst_22 = arith.constant dense<0.000000e+00> : vector<8xf32>
    %53 = vector.multi_reduction <add>, %52, %cst_22 [1] : vector<8x512xf32> to vector<8xf32>
    %54 = vector.shape_cast %53 : vector<8xf32> to vector<8x1xf32>
    %cst_23 = arith.constant 5.120000e+02 : f32
    %55 = vector.broadcast %cst_23 : f32 to vector<8x1xf32>
    %56 = arith.divf %54, %55 : vector<8x1xf32>
    %cst_24 = arith.constant 9.99999996E-13 : f32
    %57 = vector.broadcast %cst_24 : f32 to vector<8x1xf32>
    %58 = arith.addf %56, %57 : vector<8x1xf32>
    %59 = math.rsqrt %58 : vector<8x1xf32>
    %60 = vector.broadcast %59 : vector<8x1xf32> to vector<8x512xf32>
    %61 = arith.mulf %51, %60 : vector<8x512xf32>
    %c0_25 = arith.constant 0 : index
    %c0_26 = arith.constant 0 : index
    %62 = vector.load %arg4[%c0_25, %c0_26] : memref<1x512xf32, #tpu.memory_space<vmem>>, vector<1x512xf32>
    %63 = vector.broadcast %62 : vector<1x512xf32> to vector<8x512xf32>
    %64 = arith.mulf %61, %63 : vector<8x512xf32>
    %c0_27 = arith.constant 0 : index
    %c0_28 = arith.constant 0 : index
    %65 = vector.load %arg5[%c0_27, %c0_28] : memref<1x512xf32, #tpu.memory_space<vmem>>, vector<1x512xf32>
    %66 = vector.broadcast %65 : vector<1x512xf32> to vector<8x512xf32>
    %67 = arith.addf %64, %66 : vector<8x512xf32>
    %c0_29 = arith.constant 0 : index
    %c0_30 = arith.constant 0 : index
    %68 = vector.load %arg6[%c0_29, %c0_30] : memref<8x512xf32, #tpu.memory_space<vmem>>, vector<8x512xf32>
    tpu.vector_store %arg6[%c0_29, %c0_30], %67 {strides = array<i32>} : memref<8x512xf32, #tpu.memory_space<vmem>>, vector<8x512xf32>,
    return
  }
  func.func @transform_0(%arg0: i32) -> (i32, i32) {
    %c0_i32 = arith.constant 0 : i32
    %c0_i32_0 = arith.constant 0 : i32
    return %arg0, %c0_i32 : i32, i32
  }
  func.func @transform_1(%arg0: i32) -> (i32, i32) {
    %c0_i32 = arith.constant 0 : i32
    %c0_i32_0 = arith.constant 0 : i32
    %c0_i32_1 = arith.constant 0 : i32
    return %c0_i32, %c0_i32_0 : i32, i32
  }
  func.func @transform_2(%arg0: i32) -> (i32, i32) {
    %c0_i32 = arith.constant 0 : i32
    %c0_i32_0 = arith.constant 0 : i32
    %c0_i32_1 = arith.constant 0 : i32
    return %c0_i32, %c0_i32_0 : i32, i32
  }
  func.func @transform_3(%arg0: i32) -> (i32, i32) {
    %c0_i32 = arith.constant 0 : i32
    %c0_i32_0 = arith.constant 0 : i32
    %c0_i32_1 = arith.constant 0 : i32
    return %c0_i32, %c0_i32_0 : i32, i32
  }
  func.func @transform_4(%arg0: i32) -> (i32, i32) {
    %c0_i32 = arith.constant 0 : i32
    %c0_i32_0 = arith.constant 0 : i32
    %c0_i32_1 = arith.constant 0 : i32
    return %c0_i32, %c0_i32_0 : i32, i32
  }
  func.func @transform_5(%arg0: i32) -> (i32, i32) {
    %c0_i32 = arith.constant 0 : i32
    %c0_i32_0 = arith.constant 0 : i32
    return %arg0, %c0_i32 : i32, i32
  }
}

</mosaic_0001>

<llo_original>
// kernel: tpu_custom_call.1
$region0: #{tpu_custom_call.1}
  #allocation0 [shape = 'u32[]', space=smem, size = 0x4, offset = 0x4, fixed_abs, tag = 'smem constant byte address 0x4 - core index']
  #allocation1 [shape = 'u32[144,128]{1,0:T(1,128)}', space=vmem, size = 0x12000, scoped, tag = 'internal scratch']
  %s0 = inlined_call_operand.hbm [shape: bf16[16,32], index: 0, kind: input, shape index: {}]
  %s1 = inlined_call_operand.hbm [shape: bf16[32,512], index: 1, kind: input, shape index: {}]
  %s2 = inlined_call_operand.hbm [shape: f32[1,512], index: 2, kind: input, shape index: {}]
  %s3 = inlined_call_operand.vmem [shape: f32[1,512], index: 3, kind: input, shape index: {}]
  %s4 = inlined_call_operand.hbm [shape: f32[1,512], index: 4, kind: input, shape index: {}]
  %s5 = inlined_call_operand.hbm [shape: f32[16,512], index: 5, kind: output, shape index: {}]
  %s6 = sld [smem:[#allocation0]]
  $region69: #{tpu_custom_call.1} parent=0
    _
  %s8 = ssub.s32 1, %s6
  %s9 = scalar_select 0, %s8, %s6
  $region1: #{tpu_custom_call.1} parent=0
    #allocation2 [shape = 'u8[4096]{0}', space=vmem, size = 0x1000, scoped, tag = 'input window, operand 0']
    #allocation3 [shape = 's32[2]{0}', space=sflag, size = 0x8, scoped, tag = 'scoped memory for tpu_custom_call.1']
    #allocation4 [shape = 's32[2]{0}', space=sflag, size = 0x8, scoped, tag = 'scoped memory for tpu_custom_call.1']
    #allocation5 [shape = 'u8[32768]{0}', space=vmem, size = 0x8000, scoped, tag = 'input window, operand 1, single buffered']
    #allocation6 [shape = 's32[1]{0}', space=sflag, size = 0x4, scoped, tag = 'scoped memory for tpu_custom_call.1']
    #allocation7 [shape = 'u8[2048]{0}', space=vmem, size = 0x800, scoped, tag = 'input window, operand 2, single buffered']
    #allocation8 [shape = 'u8[2048]{0}', space=vmem, size = 0x800, scoped, tag = 'input window, operand 4, single buffered']
    #allocation9 [shape = 's32[1]{0}', space=sflag, size = 0x4, scoped, tag = 'scoped memory for tpu_custom_call.1']
    #allocation10 [shape = 'u8[32768]{0}', space=vmem, size = 0x8000, scoped, tag = 'output window, operand 0']
    %10 = vsyncpa [#allocation3], 0
    %s11 = scalar_lea.sflag [#allocation3], 1
    %12 = vsyncpa %s11, 0
    %13 = vsyncpa [#allocation6], 0
    %14 = vsyncpa [#allocation9], 0
    %15 = vsyncpa [#allocation4], 0
    %s16 = scalar_lea.sflag [#allocation4], 1
    %17 = vsyncpa %s16, 0
    loop: start=0, step=1, limit=4
    $region2: #{tpu_custom_call.1} parent=1 // loop_pre_header
      _
    $region3: #{tpu_custom_call.1} parent=1 // loop_header
      %s19 = sphi 0, %s23
      %p20 = scmp.ge.s32.totalorder %s19, 4
      %s29 = sphi 0, %s31
      %s32 = sphi 0, %s29
      %s33 = sphi 0, %s32
      %s49 = sphi 0, %s33
      %s53 = sphi 0, %s53
      %s55 = sphi 0, %s53
      %s56 = sphi 0, %s55
      %s70 = sphi 0, %s56
      %s74 = sphi 0, %s74
      %s76 = sphi 0, %s74
      %s77 = sphi 0, %s76
      %s91 = sphi 0, %s77
      %s95 = sphi 0, %s95
      %s97 = sphi 0, %s95
      %s98 = sphi 0, %s97
      %s112 = sphi 0, %s98
      %s116 = sphi 0, %s116
      %s118 = sphi 0, %s116
      %s119 = sphi 0, %s118
      %s133 = sphi 0, %s119
      %s139 = sphi 0, %s141
      %s142 = sphi 0, %s139
      %s143 = sphi 0, %s142
      %s159 = sphi 0, %s143
    $region4: #{tpu_custom_call.1} parent=1 // loop_header_branch
      %22 = sbr.rel (%p20) target = $region8
    $region5: #{tpu_custom_call.1} parent=1 // loop_body
      %s24 = ssub.s32 %s19, 1
      %s25 = ssub.s32 %s19, 2
      %s26 = sadd.s32 %s19, 1
      %s27 = ssub.s32 %s19, %s26
      %p28 = scmp.eq.s32.totalorder %s27, 0
      %s30 = sadd.s32 %s29, 1
      %s31 = scalar_select %p28, %s29, %s30
      %p34 = pneg %p28
      %p35 = scmp.eq.s32.totalorder %s19, 1
      %p36 = por %p34, %p35
      %p37 = scmp.ne.s32.totalorder %s29, %s32
      %p38 = scmp.eq.s32.totalorder %s19, 0
      %p39 = por %p37, %p38
      %p40 = scmp.ne.s32.totalorder %s29, %s32
      %p41 = scmp.eq.s32.totalorder %s24, 1
      %p42 = por %p40, %p41
      %p43 = scmp.ne.s32.totalorder %s32, %s33
      %p44 = scmp.eq.s32.totalorder %s24, 0
      %p45 = por %p43, %p44
      %p46 = scmp.ne.s32.totalorder %s32, %s33
      %p47 = scmp.eq.s32.totalorder %s25, 1
      %p48 = por %p46, %p47
      %p50 = scmp.ne.s32.totalorder %s33, %s49
      %p51 = scmp.eq.s32.totalorder %s25, 0
      %p52 = por %p50, %p51
      %s54 = sadd.s32 %s53, 1
      %p57 = scmp.eq.s32.totalorder %s19, 1
      %p58 = scmp.ne.s32.totalorder %s53, %s55
      %p59 = scmp.eq.s32.totalorder %s19, 0
      %p60 = por %p58, %p59
      %p61 = scmp.ne.s32.totalorder %s53, %s55
      %p62 = scmp.eq.s32.totalorder %s24, 1
      %p63 = por %p61, %p62
      %p64 = scmp.ne.s32.totalorder %s55, %s56
      %p65 = scmp.eq.s32.totalorder %s24, 0
      %p66 = por %p64, %p65
      %p67 = scmp.ne.s32.totalorder %s55, %s56
      %p68 = scmp.eq.s32.totalorder %s25, 1
      %p69 = por %p67, %p68
      %p71 = scmp.ne.s32.totalorder %s56, %s70
      %p72 = scmp.eq.s32.totalorder %s25, 0
      %p73 = por %p71, %p72
      %s75 = sadd.s32 %s74, 1
      %p78 = scmp.eq.s32.totalorder %s19, 1
      %p79 = scmp.ne.s32.totalorder %s74, %s76
      %p80 = scmp.eq.s32.totalorder %s19, 0
      %p81 = por %p79, %p80
      %p82 = scmp.ne.s32.totalorder %s74, %s76
      %p83 = scmp.eq.s32.totalorder %s24, 1
      %p84 = por %p82, %p83
      %p85 = scmp.ne.s32.totalorder %s76, %s77
      %p86 = scmp.eq.s32.totalorder %s24, 0
      %p87 = por %p85, %p86
      %p88 = scmp.ne.s32.totalorder %s76, %s77
      %p89 = scmp.eq.s32.totalorder %s25, 1
      %p90 = por %p88, %p89
      %p92 = scmp.ne.s32.totalorder %s77, %s91
      %p93 = scmp.eq.s32.totalorder %s25, 0
      %p94 = por %p92, %p93
      %s96 = sadd.s32 %s95, 1
      %p99 = scmp.eq.s32.totalorder %s19, 1
      %p100 = scmp.ne.s32.totalorder %s95, %s97
      %p101 = scmp.eq.s32.totalorder %s19, 0
      %p102 = por %p100, %p101
      %p103 = scmp.ne.s32.totalorder %s95, %s97
      %p104 = scmp.eq.s32.totalorder %s24, 1
      %p105 = por %p103, %p104
      %p106 = scmp.ne.s32.totalorder %s97, %s98
      %p107 = scmp.eq.s32.totalorder %s24, 0
      %p108 = por %p106, %p107
      %p109 = scmp.ne.s32.totalorder %s97, %s98
      %p110 = scmp.eq.s32.totalorder %s25, 1
      %p111 = por %p109, %p110
      %p113 = scmp.ne.s32.totalorder %s98, %s112
      %p114 = scmp.eq.s32.totalorder %s25, 0
      %p115 = por %p113, %p114
      %s117 = sadd.s32 %s116, 1
      %p120 = scmp.eq.s32.totalorder %s19, 1
      %p121 = scmp.ne.s32.totalorder %s116, %s118
      %p122 = scmp.eq.s32.totalorder %s19, 0
      %p123 = por %p121, %p122
      %p124 = scmp.ne.s32.totalorder %s116, %s118
      %p125 = scmp.eq.s32.totalorder %s24, 1
      %p126 = por %p124, %p125
      %p127 = scmp.ne.s32.totalorder %s118, %s119
      %p128 = scmp.eq.s32.totalorder %s24, 0
      %p129 = por %p127, %p128
      %p130 = scmp.ne.s32.totalorder %s118, %s119
      %p131 = scmp.eq.s32.totalorder %s25, 1
      %p132 = por %p130, %p131
      %p134 = scmp.ne.s32.totalorder %s119, %s133
      %p135 = scmp.eq.s32.totalorder %s25, 0
      %p136 = por %p134, %p135
      %s137 = ssub.s32 %s19, %s26
      %p138 = scmp.eq.s32.totalorder %s137, 0
      %s140 = sadd.s32 %s139, 1
      %s141 = scalar_select %p138, %s139, %s140
      %p144 = pneg %p138
      %p145 = scmp.eq.s32.totalorder %s19, 1
      %p146 = por %p144, %p145
      %p147 = scmp.ne.s32.totalorder %s139, %s142
      %p148 = scmp.eq.s32.totalorder %s19, 0
      %p149 = por %p147, %p148
      %p150 = scmp.ne.s32.totalorder %s139, %s142
      %p151 = scmp.eq.s32.totalorder %s24, 1
      %p152 = por %p150, %p151
      %p153 = scmp.ne.s32.totalorder %s142, %s143
      %p154 = scmp.eq.s32.totalorder %s24, 0
      %p155 = por %p153, %p154
      %p156 = scmp.ne.s32.totalorder %s142, %s143
      %p157 = scmp.eq.s32.totalorder %s25, 1
      %p158 = por %p156, %p157
      %p160 = scmp.ne.s32.totalorder %s143, %s159
      %p161 = scmp.eq.s32.totalorder %s25, 0
      %p162 = por %p160, %p161
      %p163 = scmp.le.s32.totalorder 1, %s19
      %p164 = scmp.lt.s32.totalorder %s19, 3
      %p165 = pnand %p163, %p164
      %p166 = pneg %p165
      // Predicated region
      $region9: #{tpu_custom_call.1} parent=5 // pred_check
        _
      $region10: #{tpu_custom_call.1} parent=5 // pred_check_branch
        %168 = sbr.rel (%p165) target = $region12
      $region11: #{tpu_custom_call.1} parent=5 // pred_region
        %s169 = ssub.s32 %s19, 1
        // Predicated region
        $region13: #{tpu_custom_call.1} parent=11 // pred_check
          %p170 = pneg %p66
        $region14: #{tpu_custom_call.1} parent=11 // pred_check_branch
          %172 = sbr.rel (%p170) target = $region16
        $region15: #{tpu_custom_call.1} parent=11 // pred_region
          %s174 = ssub.s32 1024, 1024
          %175 = vsyncadd [#allocation6], %s174
          %s176 = sshll.u32 [#allocation5], 4
          %s177 = int_to_ptr.vmem [resolvable:$true] %s176
          %182 = dma.hbm_to_vmem [thread:$0]  %s1, 1024, %s177, [#allocation6], 256, 256, 16
        $region16: #{tpu_custom_call.1} parent=11 // pred_fallthru
          _
        // Predicated region
        $region17: #{tpu_custom_call.1} parent=11 // pred_check
          %p183 = pneg %p87
        $region18: #{tpu_custom_call.1} parent=11 // pred_check_branch
          %185 = sbr.rel (%p183) target = $region20
        $region19: #{tpu_custom_call.1} parent=11 // pred_region
          %s187 = ssub.s32 64, 64
          %188 = vsyncadd [#allocation6], %s187
          %s190 = sshll.u32 [#allocation7], 4
          %s191 = int_to_ptr.vmem [resolvable:$true] %s190
          %193 = dma.hbm_to_vmem [thread:$0]  %s2, 64, %s191, [#allocation6]
        $region20: #{tpu_custom_call.1} parent=11 // pred_fallthru
          _
        // Predicated region
        $region21: #{tpu_custom_call.1} parent=11 // pred_check
          %p194 = pneg %p108
        $region22: #{tpu_custom_call.1} parent=11 // pred_check_branch
          %196 = sbr.rel (%p194) target = $region24
        $region23: #{tpu_custom_call.1} parent=11 // pred_region
          _
        $region24: #{tpu_custom_call.1} parent=11 // pred_fallthru
          _
        // Predicated region
        $region25: #{tpu_custom_call.1} parent=11 // pred_check
          %p197 = pneg %p129
        $region26: #{tpu_custom_call.1} parent=11 // pred_check_branch
          %199 = sbr.rel (%p197) target = $region28
        $region27: #{tpu_custom_call.1} parent=11 // pred_region
          %s201 = ssub.s32 64, 64
          %202 = vsyncadd [#allocation9], %s201
          %s204 = sshll.u32 [#allocation8], 4
          %s205 = int_to_ptr.vmem [resolvable:$true] %s204
          %207 = dma.hbm_to_vmem [thread:$0]  %s4, 64, %s205, [#allocation9]
        $region28: #{tpu_custom_call.1} parent=11 // pred_fallthru
          _
      $region12: #{tpu_custom_call.1} parent=5 // pred_fallthru
        _
      %p208 = scmp.lt.s32.totalorder %s19, 2
      // Predicated region
      $region29: #{tpu_custom_call.1} parent=5 // pred_check
        %p209 = pneg %p208
      $region30: #{tpu_custom_call.1} parent=5 // pred_check_branch
        %211 = sbr.rel (%p209) target = $region32
      $region31: #{tpu_custom_call.1} parent=5 // pred_region
        // Predicated region
        $region33: #{tpu_custom_call.1} parent=31 // pred_check
          %p212 = pneg %p39
        $region34: #{tpu_custom_call.1} parent=31 // pred_check_branch
          %214 = sbr.rel (%p212) target = $region36
        $region35: #{tpu_custom_call.1} parent=31 // pred_region
          %s215 = sand.u32 %s29, 1
          %s216 = scalar_lea.sflag [#allocation3], %s215
          %s217 = sand.u32 %s29, 1
          %s218 = smul.addr %s217, 4
          %s219 = scalar_lea.vmem [#allocation2], %s218
          %s221 = ssub.s32 64, 64
          %222 = vsyncadd %s216, %s221
          %s223 = smul.addr %s19, 64
          %s224 = scalar_lea.hbm %s0, %s223
          %s226 = sshll.u32 %s219, 4
          %s227 = int_to_ptr.vmem [resolvable:$true] %s226
          %229 = dma.hbm_to_vmem [thread:$0]  %s224, 64, %s227, %s216
        $region36: #{tpu_custom_call.1} parent=31 // pred_fallthru
          _
      $region32: #{tpu_custom_call.1} parent=5 // pred_fallthru
        _
      %p230 = scmp.le.s32.totalorder 1, %s19
      %p231 = scmp.lt.s32.totalorder %s19, 3
      %p232 = pnand %p230, %p231
      %p233 = pneg %p232
      // Predicated region
      $region37: #{tpu_custom_call.1} parent=5 // pred_check
        _
      $region38: #{tpu_custom_call.1} parent=5 // pred_check_branch
        %235 = sbr.rel (%p232) target = $region40
      $region39: #{tpu_custom_call.1} parent=5 // pred_region
        %s236 = ssub.s32 %s19, 1
        %s237 = sand.u32 %s32, 1
        %s238 = scalar_lea.sflag [#allocation3], %s237
        %s239 = sand.u32 %s32, 1
        %s240 = smul.addr %s239, 4
        %s241 = scalar_lea.vmem [#allocation2], %s240
        // Predicated region
        $region41: #{tpu_custom_call.1} parent=39 // pred_check
          %p242 = pneg %p45
        $region42: #{tpu_custom_call.1} parent=39 // pred_check_branch
          %244 = sbr.rel (%p242) target = $region44
        $region43: #{tpu_custom_call.1} parent=39 // pred_region
          %245 = dma.done %s238, 64
        $region44: #{tpu_custom_call.1} parent=39 // pred_fallthru
          _
        // Predicated region
        $region45: #{tpu_custom_call.1} parent=39 // pred_check
          %p246 = pneg %p66
        $region46: #{tpu_custom_call.1} parent=39 // pred_check_branch
          %248 = sbr.rel (%p246) target = $region48
        $region47: #{tpu_custom_call.1} parent=39 // pred_region
          %249 = dma.done [#allocation6], 1024
        $region48: #{tpu_custom_call.1} parent=39 // pred_fallthru
          _
        // Predicated region
        $region49: #{tpu_custom_call.1} parent=39 // pred_check
          %p250 = pneg %p87
        $region50: #{tpu_custom_call.1} parent=39 // pred_check_branch
          %252 = sbr.rel (%p250) target = $region52
        $region51: #{tpu_custom_call.1} parent=39 // pred_region
          %253 = dma.done [#allocation6], 64
        $region52: #{tpu_custom_call.1} parent=39 // pred_fallthru
          _
        // Predicated region
        $region53: #{tpu_custom_call.1} parent=39 // pred_check
          %p254 = pneg %p129
        $region54: #{tpu_custom_call.1} parent=39 // pred_check_branch
          %256 = sbr.rel (%p254) target = $region56
        $region55: #{tpu_custom_call.1} parent=39 // pred_region
          %257 = dma.done [#allocation9], 64
        $region56: #{tpu_custom_call.1} parent=39 // pred_fallthru
          _
        %s258 = sand.u32 %s32, 1
        %s259 = scalar_lea.sflag [#allocation3], %s258
        %s260 = sand.u32 %s32, 1
        %s261 = smul.addr %s260, 4
        %s262 = scalar_lea.vmem [#allocation2], %s261
        %p263 = pneg %p45
        %p264 = pneg %p42
        %p265 = pneg %p66
        %p266 = pneg %p63
        %p267 = pneg %p87
        %p268 = pneg %p84
        %p269 = pneg %p108
        %p270 = pneg %p105
        %p271 = pneg %p129
        %p272 = pneg %p126
        %p273 = pneg %p155
        %p274 = pneg %p152
        %s275 = sand.u32 %s142, 1
        %s276 = scalar_lea.sflag [#allocation4], %s275
        %s277 = sand.u32 %s142, 1
        %s278 = smul.addr %s277, 32
        %s279 = scalar_lea.vmem [#allocation10], %s278
        %v281 = vld [vmem:[%s241] sm:$0xf]
        %v282 = vld [vmem:[#allocation5] sm:$0xff]
        %v283 = vld [vmem:[#allocation5 + $0x8] sm:$0xff]
        %v284 = vld [vmem:[#allocation5 + $0x10] sm:$0xff]
        %v285 = vld [vmem:[#allocation5 + $0x18] sm:$0xff]
        %v286 = vld [vmem:[#allocation5 + $0x20] sm:$0xff]
        %v287 = vld [vmem:[#allocation5 + $0x28] sm:$0xff]
        %v288 = vld [vmem:[#allocation5 + $0x30] sm:$0xff]
        %v289 = vld [vmem:[#allocation5 + $0x38] sm:$0xff]
        %v290 = vld [vmem:[#allocation7] sm:$0xf]
        %v292 = vlaneseq
        %v293 = vshrl.u32 %v292, 7
        %v294 = vsub.s32 0, %v293
        %v295 = vrot.slane %v290, %v294
        %v296 = vlaneseq
        %v297 = vshrl.u32 %v296, 7
        %v298 = vsub.s32 1, %v297
        %v299 = vrot.slane %v290, %v298
        %v300 = vlaneseq
        %v301 = vshrl.u32 %v300, 7
        %v302 = vsub.s32 2, %v301
        %v303 = vrot.slane %v290, %v302
        %v304 = vlaneseq
        %v305 = vshrl.u32 %v304, 7
        %v306 = vsub.s32 3, %v305
        %v307 = vrot.slane %v290, %v306
        %v320 = vunpack.c.l.b16 %v282
        %v321 = vunpack.c.h.b16 %v282
        %v322 = vunpack.c.l.b16 %v283
        %v323 = vunpack.c.h.b16 %v283
        %v324 = vunpack.c.l.b16 %v284
        %v325 = vunpack.c.h.b16 %v284
        %v326 = vunpack.c.l.b16 %v285
        %v327 = vunpack.c.h.b16 %v285
        %v328 = vunpack.c.l.b16 %v286
        %v329 = vunpack.c.h.b16 %v286
        %v330 = vunpack.c.l.b16 %v287
        %v331 = vunpack.c.h.b16 %v287
        %v332 = vunpack.c.l.b16 %v288
        %v333 = vunpack.c.h.b16 %v288
        %v334 = vunpack.c.l.b16 %v289
        %v335 = vunpack.c.h.b16 %v289
        %v336 = vpack.c.b16 %v324, %v320
        %v337 = vpack.c.b16 %v325, %v321
        %v338 = vpack.c.b16 %v326, %v322
        %v339 = vpack.c.b16 %v327, %v323
        %v340 = vpack.c.b16 %v332, %v328
        %v341 = vpack.c.b16 %v333, %v329
        %v342 = vpack.c.b16 %v334, %v330
        %v343 = vpack.c.b16 %v335, %v331
        %vm352 = vcmask 261120
        %v354 = vsel %vm352, %v281, 0
        %356 = vmatprep.subr.bf16.mxu0 0
        %357 = vmatpush1.bf16.msra.mxu0 0
        %358 = vmatprep.subr.bf16.mxu0 0
        %359 = vmatpush1.bf16.msra.mxu0 0
        %360 = vmatprep.subr.bf16.mxu0 0
        %361 = vmatpush1.bf16.msra.mxu0 0
        %362 = vmatprep.subr.bf16.mxu0 0
        %363 = vmatpush1.bf16.msra.mxu0 0
        %364 = vmatprep.subr.bf16.mxu0 0
        %365 = vmatpush1.bf16.msra.mxu0 0
        %366 = vmatprep.subr.bf16.mxu0 0
        %367 = vmatpush1.bf16.msra.mxu0 0
        %368 = vmatprep.subr.bf16.mxu0 %v341
        %369 = vmatpush1.bf16.msra.mxu0 %v340
        %370 = vmatprep.subr.bf16.mxu0 %v337
        %371 = vmatpush1.bf16.msra.mxu0 %v336
        %372 = vmatprep.subr.bf16.mxu0 0
        %373 = vmatpush2.bf16.msra.mxu0 0
        %374 = vmatprep.subr.bf16.mxu0 0
        %375 = vmatpush2.bf16.msra.mxu0 0
        %376 = vmatprep.subr.bf16.mxu0 0
        %377 = vmatpush2.bf16.msra.mxu0 0
        %378 = vmatprep.subr.bf16.mxu0 0
        %379 = vmatpush2.bf16.msra.mxu0 0
        %380 = vmatprep.subr.bf16.mxu0 0
        %381 = vmatpush2.bf16.msra.mxu0 0
        %382 = vmatprep.subr.bf16.mxu0 0
        %383 = vmatpush2.bf16.msra.mxu0 0
        %384 = vmatprep.subr.bf16.mxu0 0
        %385 = vmatpush2.bf16.msra.mxu0 0
        %386 = vmatprep.subr.bf16.mxu0 0
        %387 = vmatpush2.bf16.msra.mxu0 0
        %388 = vmatprep.mubr.bf16.mxu0 0
        %389 = vmatmul.mubr.bf16.gmra.mxu0 %v354
        %v390 = vpop.f32.mrf.mxu0
        %v391 = vadd.f32 %v295, %v390
        %v392 = vpop.f32.mrf.mxu0
        %v393 = vadd.f32 %v299, %v392
        %v394 = vpop.f32.mrf.mxu0
        %v395 = vpop.f32.mrf.mxu0
        %396 = vdwg.mxu0
        %397 = vmatprep.subr.bf16.mxu0 0
        %398 = vmatpush1.bf16.msra.mxu0 0
        %399 = vmatprep.subr.bf16.mxu0 0
        %400 = vmatpush1.bf16.msra.mxu0 0
        %401 = vmatprep.subr.bf16.mxu0 0
        %402 = vmatpush1.bf16.msra.mxu0 0
        %403 = vmatprep.subr.bf16.mxu0 0
        %404 = vmatpush1.bf16.msra.mxu0 0
        %405 = vmatprep.subr.bf16.mxu0 0
        %406 = vmatpush1.bf16.msra.mxu0 0
        %407 = vmatprep.subr.bf16.mxu0 0
        %408 = vmatpush1.bf16.msra.mxu0 0
        %409 = vmatprep.subr.bf16.mxu0 %v343
        %410 = vmatpush1.bf16.msra.mxu0 %v342
        %411 = vmatprep.subr.bf16.mxu0 %v339
        %412 = vmatpush1.bf16.msra.mxu0 %v338
        %413 = vmatprep.subr.bf16.mxu0 0
        %414 = vmatpush2.bf16.msra.mxu0 0
        %415 = vmatprep.subr.bf16.mxu0 0
        %416 = vmatpush2.bf16.msra.mxu0 0
        %417 = vmatprep.subr.bf16.mxu0 0
        %418 = vmatpush2.bf16.msra.mxu0 0
        %419 = vmatprep.subr.bf16.mxu0 0
        %420 = vmatpush2.bf16.msra.mxu0 0
        %421 = vmatprep.subr.bf16.mxu0 0
        %422 = vmatpush2.bf16.msra.mxu0 0
        %423 = vmatprep.subr.bf16.mxu0 0
        %424 = vmatpush2.bf16.msra.mxu0 0
        %425 = vmatprep.subr.bf16.mxu0 0
        %426 = vmatpush2.bf16.msra.mxu0 0
        %427 = vmatprep.subr.bf16.mxu0 0
        %428 = vmatpush2.bf16.msra.mxu0 0
        %429 = vmatprep.mubr.bf16.mxu0 0
        %430 = vmatmul.mubr.bf16.gmra.mxu0 %v354
        %v431 = vpop.f32.mrf.mxu0
        %v432 = vadd.f32 %v303, %v431
        %v433 = vpop.f32.mrf.mxu0
        %v434 = vadd.f32 %v307, %v433
        %v435 = vpop.f32.mrf.mxu0
        %v436 = vpop.f32.mrf.mxu0
        %437 = vdwg.mxu0
        %v438 = vmul.f32 %v391, 0.5
        %v439 = vmul.f32 %v393, 0.5
        %v440 = vmul.f32 %v432, 0.5
        %v441 = vmul.f32 %v434, 0.5
        %v442 = vmul.f32 %v391, 0.70710677
        %v443 = vmul.f32 %v393, 0.70710677
        %v444 = vmul.f32 %v432, 0.70710677
        %v445 = vmul.f32 %v434, 0.70710677
        %vm446 = vcmp.lt.f32.partialorder %v442, 0.0
        %vm447 = vcmp.lt.f32.partialorder %v443, 0.0
        %vm448 = vcmp.lt.f32.partialorder %v444, 0.0
        %vm449 = vcmp.lt.f32.partialorder %v445, 0.0
        %v450 = vsel %vm446, -1.0, 1.0
        %v451 = vsel %vm447, -1.0, 1.0
        %v452 = vsel %vm448, -1.0, 1.0
        %v453 = vsel %vm449, -1.0, 1.0
        %v454 = vand.u32 2147483647, %v442
        %v455 = vand.u32 2147483647, %v443
        %v456 = vand.u32 2147483647, %v444
        %v457 = vand.u32 2147483647, %v445
        %v458 = vmul.f32 %v454, 0.3275911
        %v459 = vmul.f32 %v455, 0.3275911
        %v460 = vmul.f32 %v456, 0.3275911
        %v461 = vmul.f32 %v457, 0.3275911
        %v462 = vadd.f32 %v458, 1.0
        %v463 = vadd.f32 %v459, 1.0
        %v464 = vadd.f32 %v460, 1.0
        %v465 = vadd.f32 %v461, 1.0
        %v466 = vrcp.pop %v462
        %v467 = vrcp.pop %v463
        %v468 = vrcp.pop %v464
        %v469 = vrcp.pop %v465
        %v470 = vmul.f32 %v466, 1.0614054
        %v471 = vmul.f32 %v467, 1.0614054
        %v472 = vmul.f32 %v468, 1.0614054
        %v473 = vmul.f32 %v469, 1.0614054
        %v474 = vadd.f32 %v470, -1.4531521
        %v475 = vadd.f32 %v471, -1.4531521
        %v476 = vadd.f32 %v472, -1.4531521
        %v477 = vadd.f32 %v473, -1.4531521
        %v478 = vmul.f32 %v474, %v466
        %v479 = vmul.f32 %v475, %v467
        %v480 = vmul.f32 %v476, %v468
        %v481 = vmul.f32 %v477, %v469
        %v482 = vadd.f32 %v478, 1.4214138
        %v483 = vadd.f32 %v479, 1.4214138
        %v484 = vadd.f32 %v480, 1.4214138
        %v485 = vadd.f32 %v481, 1.4214138
        %v486 = vmul.f32 %v482, %v466
        %v487 = vmul.f32 %v483, %v467
        %v488 = vmul.f32 %v484, %v468
        %v489 = vmul.f32 %v485, %v469
        %v490 = vadd.f32 %v486, -0.28449672
        %v491 = vadd.f32 %v487, -0.28449672
        %v492 = vadd.f32 %v488, -0.28449672
        %v493 = vadd.f32 %v489, -0.28449672
        %v494 = vmul.f32 %v490, %v466
        %v495 = vmul.f32 %v491, %v467
        %v496 = vmul.f32 %v492, %v468
        %v497 = vmul.f32 %v493, %v469
        %v498 = vadd.f32 %v494, 0.2548296
        %v499 = vadd.f32 %v495, 0.2548296
        %v500 = vadd.f32 %v496, 0.2548296
        %v501 = vadd.f32 %v497, 0.2548296
        %v502 = vmul.f32 %v498, %v466
        %v503 = vmul.f32 %v499, %v467
        %v504 = vmul.f32 %v500, %v468
        %v505 = vmul.f32 %v501, %v469
        %v506 = vmul.f32 %v454, %v454
        %v507 = vmul.f32 %v455, %v455
        %v508 = vmul.f32 %v456, %v456
        %v509 = vmul.f32 %v457, %v457
        %v510 = vsub.f32 0.0, %v506
        %v511 = vsub.f32 0.0, %v507
        %v512 = vsub.f32 0.0, %v508
        %v513 = vsub.f32 0.0, %v509
        %v514 = vmul.f32 %v510, 1.442695
        %v515 = vpow.pop %v514
        %v516 = vmul.f32 %v511, 1.442695
        %v517 = vpow.pop %v516
        %v518 = vmul.f32 %v512, 1.442695
        %v519 = vpow.pop %v518
        %v520 = vmul.f32 %v513, 1.442695
        %v521 = vpow.pop %v520
        %v522 = vmul.f32 %v502, %v515
        %v523 = vmul.f32 %v503, %v517
        %v524 = vmul.f32 %v504, %v519
        %v525 = vmul.f32 %v505, %v521
        %v526 = vsub.f32 1.0, %v522
        %v527 = vsub.f32 1.0, %v523
        %v528 = vsub.f32 1.0, %v524
        %v529 = vsub.f32 1.0, %v525
        %v530 = vmul.f32 %v450, %v526
        %v531 = vmul.f32 %v451, %v527
        %v532 = vmul.f32 %v452, %v528
        %v533 = vmul.f32 %v453, %v529
        %v534 = vadd.f32 %v530, 1.0
        %v535 = vadd.f32 %v531, 1.0
        %v536 = vadd.f32 %v532, 1.0
        %v537 = vadd.f32 %v533, 1.0
        %v538 = vmul.f32 %v438, %v534
        %v539 = vmul.f32 %v439, %v535
        %v540 = vmul.f32 %v440, %v536
        %v541 = vmul.f32 %v441, %v537
        %v542 = vadd.f32 %v538, %v539
        %v543 = vadd.f32 %v542, %v540
        %v544 = vadd.f32 %v543, %v541
        %545 = vadd.xlane.f32.xlu0 %v544
        %v546 = vpop.xlane.xlu0 %545
        %v547 = vrcp.pop 512.0
        %v548 = vmul.f32 %v546, %v547
        %v549 = vsub.f32 %v538, %v548
        %v550 = vsub.f32 %v539, %v548
        %v551 = vsub.f32 %v540, %v548
        %v552 = vsub.f32 %v541, %v548
        %v553 = vmul.f32 %v549, %v549
        %v554 = vmul.f32 %v550, %v550
        %v555 = vmul.f32 %v551, %v551
        %v556 = vmul.f32 %v552, %v552
        %v557 = vadd.f32 %v553, %v554
        %v558 = vadd.f32 %v557, %v555
        %v559 = vadd.f32 %v558, %v556
        %560 = vadd.xlane.f32.xlu0 %v559
        %v561 = vpop.xlane.xlu0 %560
        %v562 = vmul.f32 %v561, %v547
        %v563 = vadd.f32 %v562, 1e-12
        %v564 = vrsqrt.pop %v563
        %v565 = vmul.f32 %v549, %v564
        %v566 = vmul.f32 %v550, %v564
        %v567 = vmul.f32 %v551, %v564
        %v568 = vmul.f32 %v552, %v564
        %v569 = vld [vmem:[%s3] sm:$0xf]
        %v571 = vlaneseq
        %v572 = vshrl.u32 %v571, 7
        %v573 = vsub.s32 0, %v572
        %v574 = vrot.slane %v569, %v573
        %v575 = vlaneseq
        %v576 = vshrl.u32 %v575, 7
        %v577 = vsub.s32 1, %v576
        %v578 = vrot.slane %v569, %v577
        %v579 = vlaneseq
        %v580 = vshrl.u32 %v579, 7
        %v581 = vsub.s32 2, %v580
        %v582 = vrot.slane %v569, %v581
        %v583 = vlaneseq
        %v584 = vshrl.u32 %v583, 7
        %v585 = vsub.s32 3, %v584
        %v586 = vrot.slane %v569, %v585
        %v591 = vmul.f32 %v565, %v574
        %v592 = vmul.f32 %v566, %v578
        %v593 = vmul.f32 %v567, %v582
        %v594 = vmul.f32 %v568, %v586
        %v595 = vld [vmem:[#allocation8] sm:$0xf]
        %v597 = vlaneseq
        %v598 = vshrl.u32 %v597, 7
        %v599 = vsub.s32 0, %v598
        %v600 = vrot.slane %v595, %v599
        %v601 = vlaneseq
        %v602 = vshrl.u32 %v601, 7
        %v603 = vsub.s32 1, %v602
        %v604 = vrot.slane %v595, %v603
        %v605 = vlaneseq
        %v606 = vshrl.u32 %v605, 7
        %v607 = vsub.s32 2, %v606
        %v608 = vrot.slane %v595, %v607
        %v609 = vlaneseq
        %v610 = vshrl.u32 %v609, 7
        %v611 = vsub.s32 3, %v610
        %v612 = vrot.slane %v595, %v611
        %v617 = vadd.f32 %v591, %v600
        %v618 = vadd.f32 %v592, %v604
        %v619 = vadd.f32 %v593, %v608
        %v620 = vadd.f32 %v594, %v612
        %621 = vst [vmem:[%s279] sm:$0xff] %v617
        %622 = vst [vmem:[%s279 + $0x8] sm:$0xff] %v618
        %623 = vst [vmem:[%s279 + $0x10] sm:$0xff] %v619
        %624 = vst [vmem:[%s279 + $0x18] sm:$0xff] %v620
        %s625 = sand.u32 %s142, 1
        %s626 = scalar_lea.sflag [#allocation4], %s625
        %s627 = sand.u32 %s142, 1
        %s628 = smul.addr %s627, 32
        %s629 = scalar_lea.vmem [#allocation10], %s628
        // Predicated region
        $region57: #{tpu_custom_call.1} parent=39 // pred_check
          %p630 = pneg %p152
        $region58: #{tpu_custom_call.1} parent=39 // pred_check_branch
          %632 = sbr.rel (%p630) target = $region60
        $region59: #{tpu_custom_call.1} parent=39 // pred_region
          %s634 = ssub.s32 512, 512
          %635 = vsyncadd %s626, %s634
          %s636 = smul.addr %s24, 4
          %s637 = smul.addr %s636, 128
          %s638 = scalar_lea.hbm %s5, %s637
          %s640 = sshll.u32 %s629, 4
          %s641 = int_to_ptr.vmem [resolvable:$true] %s640
          %643 = dma.vmem_to_hbm [thread:$0]  %s641, 512, %s638, %s626
        $region60: #{tpu_custom_call.1} parent=39 // pred_fallthru
          _
      $region40: #{tpu_custom_call.1} parent=5 // pred_fallthru
        _
      %p644 = scmp.le.s32.totalorder 2, %s19
      // Predicated region
      $region61: #{tpu_custom_call.1} parent=5 // pred_check
        %p645 = pneg %p644
      $region62: #{tpu_custom_call.1} parent=5 // pred_check_branch
        %647 = sbr.rel (%p645) target = $region64
      $region63: #{tpu_custom_call.1} parent=5 // pred_region
        %s648 = ssub.s32 %s19, 2
        // Predicated region
        $region65: #{tpu_custom_call.1} parent=63 // pred_check
          %p649 = pneg %p158
        $region66: #{tpu_custom_call.1} parent=63 // pred_check_branch
          %651 = sbr.rel (%p649) target = $region68
        $region67: #{tpu_custom_call.1} parent=63 // pred_region
          %s652 = sand.u32 %s143, 1
          %s653 = scalar_lea.sflag [#allocation4], %s652
          %s654 = sand.u32 %s143, 1
          %s655 = smul.addr %s654, 32
          %s656 = scalar_lea.vmem [#allocation10], %s655
          %657 = dma.done %s653, 512
        $region68: #{tpu_custom_call.1} parent=63 // pred_fallthru
          _
      $region64: #{tpu_custom_call.1} parent=5 // pred_fallthru
        _
    $region6: #{tpu_custom_call.1} parent=1 // loop_footer
      %s23 = sadd.s32 1, %s19
    $region7: #{tpu_custom_call.1} parent=1 // loop_footer_branch
      %18 = sbr.rel target = $region3
    $region8: #{tpu_custom_call.1} parent=1 // loop_exit
      _
    %658 = vsyncpa [#allocation3], 1
    %s659 = scalar_lea.sflag [#allocation3], 1
    %660 = vsyncpa %s659, 1
    %661 = vsyncpa [#allocation6], 1
    %662 = vsyncpa [#allocation9], 1
    %663 = vsyncpa [#allocation4], 1
    %s664 = scalar_lea.sflag [#allocation4], 1
    %665 = vsyncpa %s664, 1

</llo_original>
